<compile_context>
chip_gen: v5e
topology: v5e:2x2
jax: 0.10.0
libtpu: 0.0.40
codegen_flags: <defaults>
</compile_context>

<pallas_src>
import numpy as np

import jax
import jax.numpy as jnp
from jax.experimental import pallas as pl
from jax.experimental.pallas import tpu as pltpu

_LANE = 128
_TILE_HW_MAX = 2048   # lanes per spatial tile: >=512 is ~85% of HBM roofline;
                      # 2048 keeps per-step VMEM tiny even on v7x (64 MiB).
_C_BLK_MAX = 32       # channels per grid step when the channel axis is gridded


def _round_up(a, b):
    return (a + b - 1) // b * b


def _pick_c_blk(C, itemsize):
    """Channel block size: multiple of the dtype's native sublane tile that
    divides C, or the full C (always legal as a full-dim block)."""
    sub = 8 * max(1, 4 // max(1, itemsize))   # f32:8, bf16:16, int8:32
    if C <= _C_BLK_MAX or C % sub != 0:
        return C
    cb = _C_BLK_MAX - (_C_BLK_MAX % sub)
    while cb >= sub:
        if C % cb == 0:
            return cb
        cb -= sub
    return C


def _make_channel_max_kernel(C_BLK, lo_blk, lo, hi, n_cblk):
    def kernel(x_ref, maxv_ref, maxi_ref):
        k = pl.program_id(2)

        @pl.when(k == 0)
        def _init():
            maxv_ref[...] = jnp.full(maxv_ref.shape, -jnp.inf, maxv_ref.dtype)
            maxi_ref[...] = jnp.zeros(maxi_ref.shape, maxi_ref.dtype)

        # Load at storage dtype (e.g. bf16) and upcast in-register; all
        # max/compare math stays in f32 (safe on v5e, matches f32 reference).
        x = x_ref[0].astype(jnp.float32)            # (C_BLK, T)

        run_v = maxv_ref[0]                         # (1, T) f32 running max
        run_i = maxi_ref[0]                         # (1, T) i32 running argmax

        if n_cblk == 1:
            # Single channel block: channel ids are static, rows outside
            # [lo, hi) are simply skipped at trace time.
            for r in range(C_BLK):
                ch = lo_blk * C_BLK + r
                if ch < lo or ch >= hi:
                    continue
                v = x[r:r + 1, :]                   # (1, T)
                upd = v > run_v                     # strict >: first max wins
                run_i = jnp.where(upd, jnp.int32(ch), run_i)
                run_v = jnp.where(upd, v, run_v)
        else:
            # Channel axis is gridded; only edge blocks can be partially
            # outside [lo, hi). iota / mask hoisted out of the row loop.
            base = (lo_blk + k) * C_BLK
            ch_ids = base + jax.lax.broadcasted_iota(jnp.int32, x.shape, 0)
            x = jnp.where(jnp.logical_and(ch_ids >= lo, ch_ids < hi),
                          x, -jnp.inf)
            for r in range(C_BLK):
                v = x[r:r + 1, :]
                ci = ch_ids[r:r + 1, :]
                upd = v > run_v
                run_i = jnp.where(upd, ci, run_i)
                run_v = jnp.where(upd, v, run_v)

        maxv_ref[0] = run_v
        maxi_ref[0] = run_i

    return kernel


def _channel_max_map(x, lo, hi, *, interpret=False):
    """Dense per-position channel max / argmax of x[:, lo:hi, :, :].

    Returns (max_value [N, H*W] float32, max_idx [N, H*W] int32); max_idx uses
    the ORIGINAL channel numbering (i.e. already offset by idx_range[0]).
    """
    N, C, H, W = x.shape
    HW = H * W
    T = min(_TILE_HW_MAX, _round_up(HW, _LANE))
    HW_pad = _round_up(HW, T)

    xr = x.reshape(N, C, HW)
    if HW_pad != HW:
        xr = jnp.pad(xr, ((0, 0), (0, 0), (0, HW_pad - HW)))

    C_BLK = _pick_c_blk(C, jnp.dtype(x.dtype).itemsize)
    lo_blk = lo // C_BLK
    hi_blk = -(-hi // C_BLK)
    n_cblk = hi_blk - lo_blk      # only channel blocks overlapping [lo, hi)

    kernel = _make_channel_max_kernel(C_BLK, lo_blk, lo, hi, n_cblk)

    grid = (N, HW_pad // T, n_cblk)
    out_shape = (
        jax.ShapeDtypeStruct((N, 1, HW_pad), jnp.float32),
        jax.ShapeDtypeStruct((N, 1, HW_pad), jnp.int32),
    )
    in_specs = [
        # idx_range restriction applied here: only blocks lo_blk..hi_blk-1
        # of the channel axis are ever DMA'd from HBM.
        pl.BlockSpec((1, C_BLK, T), lambda n, s, k: (n, lo_blk + k, s)),
    ]
    out_specs = [
        # same block across k -> output stays resident in VMEM and acts as the
        # running-max / running-argmax accumulator over the channel grid axis.
        pl.BlockSpec((1, 1, T), lambda n, s, k: (n, 0, s)),
        pl.BlockSpec((1, 1, T), lambda n, s, k: (n, 0, s)),
    ]

    maxv, maxi = pl.pallas_call(
        kernel,
        out_shape=out_shape,
        grid_spec=pltpu.PrefetchScalarGridSpec(
            num_scalar_prefetch=0,
            grid=grid,
            in_specs=in_specs,
            out_specs=out_specs,
        ),
        compiler_params=pltpu.CompilerParams(
            dimension_semantics=("parallel", "parallel", "arbitrary"),
            vmem_limit_bytes=32 * 1024 * 1024,   # far above actual use; safe on v5e/v6e/v7x
        ),
        interpret=interpret,
    )(xr)

    return maxv[:, 0, :HW], maxi[:, 0, :HW]


def plugin_filter_pallas(*inputs, threshold, idx_range=None, interpret=False):
    """JAX/Pallas equivalent of FilterModule.forward (plugin_filter)."""
    assert len(inputs) >= 1
    x0 = inputs[0]
    N, C0, H, W = x0.shape
    for t in inputs[1:]:
        assert t.shape[0] == N and t.shape[2] == H and t.shape[3] == W
    HW = H * W

    if idx_range is None:
        lo, hi = 0, C0
    else:
        lo, hi = int(idx_range[0]), int(idx_range[1])
        lo, hi = max(lo, 0), min(hi, C0)
    assert 0 <= lo < hi <= C0, "idx_range must select at least one channel"

    # Dense per-position channel max / argmax from the Pallas kernel.
    # Note: max_idx is in the original channel numbering (offset by lo).
    maxv, maxi = _channel_max_map(x0, lo, hi, interpret=interpret)   # [N, HW]

    # keep-mask derived in glue (the kernel does NOT write a dense mask).
    keep = maxv >= jnp.float32(threshold)                  # [N, HW] bool (f32 compare)
    counts = jnp.sum(keep.astype(jnp.int32), axis=1)       # [N]

    # On-device compaction: stable sort pulls kept positions to the front
    # while preserving their original spatial order.
    sort_key = jnp.where(keep, 0, 1).astype(jnp.int32)
    order = jnp.argsort(sort_key, axis=1, stable=True)     # [N, HW]

    hw = jnp.arange(HW, dtype=jnp.int32)
    coords = jnp.stack([hw // W, hw % W], axis=-1)          # [HW, 2]

    maxv_c = jnp.take_along_axis(maxv, order, axis=1)       # [N, HW]
    maxi_c = jnp.take_along_axis(maxi, order, axis=1)       # [N, HW]
    coord_c = coords[order]                                  # [N, HW, 2]
    datas_c = []
    for t in inputs:
        d = jnp.transpose(t.reshape(N, t.shape[1], HW), (0, 2, 1))   # [N, HW, C_i]
        datas_c.append(jnp.take_along_axis(d, order[:, :, None], axis=1))

    # Only host sync: N scalar survivor counts (M differs per batch, so the
    # python-list-of-variable-length-tensors output requires them).
    counts_host = np.asarray(jax.device_get(counts))
    out = []
    for b in range(N):
        m = int(counts_host[b])
        row = [maxv_c[b, :m], maxi_c[b, :m], coord_c[b, :m]]
        row.extend(dc[b, :m] for dc in datas_c)
        out.append(row)
    return out


# ----------------------------- reference & test -----------------------------

def _reference_filter(np_inputs, threshold, idx_range):
    x0 = np.asarray(np_inputs[0], dtype=np.float32)
    N, C, H, W = x0.shape
    lo, hi = (0, C) if idx_range is None else idx_range
    sl = x0[:, lo:hi].reshape(N, hi - lo, H * W)
    mv = sl.max(axis=1)
    mi = sl.argmax(axis=1).astype(np.int64) + lo   # original channel numbering
    out = []
    for b in range(N):
        keep = np.nonzero(mv[b] >= threshold)[0]
        coord = np.stack([keep // W, keep % W], axis=-1)
        row = [mv[b, keep], mi[b, keep], coord]
        for t in np_inputs:
            tt = np.asarray(t, dtype=np.float32).reshape(N, t.shape[1], H * W)
            row.append(tt[b][:, keep].T)
        out.append(row)
    return out


def _check(got, ref):
    assert len(got) == len(ref)
    for b in range(len(ref)):
        g, r = got[b], ref[b]
        assert len(g) == len(r)
        np.testing.assert_allclose(np.asarray(g[0], np.float32), r[0],
                                   rtol=1e-6, atol=1e-6)
        np.testing.assert_array_equal(np.asarray(g[1]), r[1])
        np.testing.assert_array_equal(np.asarray(g[2]), r[2])
        for i in range(3, len(r)):
            np.testing.assert_allclose(np.asarray(g[i], np.float32), r[i],
                                       rtol=1e-6, atol=1e-6)


if __name__ == "__main__":
    key = jax.random.PRNGKey(0)
    keys = jax.random.split(key, 4)

    # ---- case 1: f32 inputs, small C, idx_range restricting channels ----
    N, H, W = 2, 16, 16
    x0 = jax.random.uniform(keys[0], (N, 4, H, W), dtype=jnp.float32)
    x1 = jax.random.uniform(keys[1], (N, 6, H, W), dtype=jnp.float32)
    thr1, rng1 = 0.55, (1, 3)
    got1 = plugin_filter_pallas(x0, x1, threshold=thr1, idx_range=rng1)
    jax.block_until_ready(got1)
    ref1 = _reference_filter([np.asarray(x0), np.asarray(x1)], thr1, rng1)
    _check(got1, ref1)

    # ---- case 2: bf16 scores, larger C so the channel axis is gridded ----
    N2, H2, W2 = 2, 8, 8
    s_f32 = jax.random.uniform(keys[2], (N2, 48, H2, W2), dtype=jnp.float32)
    s_bf16 = s_f32.astype(jnp.bfloat16)
    d1 = jax.random.uniform(keys[3], (N2, 3, H2, W2), dtype=jnp.float32)
    thr2, rng2 = 0.6, (5, 37)
    got2 = plugin_filter_pallas(s_bf16, d1, threshold=thr2, idx_range=rng2)
    jax.block_until_ready(got2)
    ref2 = _reference_filter(
        [np.asarray(s_bf16.astype(jnp.float32)), np.asarray(d1)], thr2, rng2)
    _check(got2, ref2)

    print("KERNEL_OK")
</pallas_src>

<mosaic_0001>
module attributes {stable_mosaic.version = 11 : i64} {
  func.func @kernel(%arg0: i32, %arg1: i32, %arg2: i32, %arg3: memref<1x4x256xf32, #tpu.memory_space<vmem>>, %arg4: memref<1x1x256xf32, #tpu.memory_space<vmem>>, %arg5: memref<1x1x256xi32, #tpu.memory_space<vmem>>) attributes {dimension_semantics = [#tpu.dimension_semantics<parallel>, #tpu.dimension_semantics<parallel>, #tpu.dimension_semantics<arbitrary>], iteration_bounds = array<i64: 2, 1, 1>, scalar_prefetch = 0 : i64, scratch_operands = 0 : i64, tpu.core_type = #tpu.core_type<tc>, window_params = [{transform_indices = @transform_0, window_bounds = array<i64: 1, 4, 256>}, {transform_indices = @transform_1, window_bounds = array<i64: 1, 1, 256>}, {transform_indices = @transform_2, window_bounds = array<i64: 1, 1, 256>}]} {
    %c0_i32 = arith.constant 0 : i32
    %0 = arith.cmpi eq, %arg2, %c0_i32 : i32
    %1 = arith.extui %0 : i1 to i32
    %c0_i32_0 = arith.constant 0 : i32
    %2 = arith.cmpi ne, %1, %c0_i32_0 : i32
    scf.if %2 {
      %cst = arith.constant 0xFF800000 : f32
      %25 = vector.broadcast %cst : f32 to vector<1x1x256xf32>
      %c0_15 = arith.constant 0 : index
      %c0_16 = arith.constant 0 : index
      %c0_17 = arith.constant 0 : index
      %26 = vector.load %arg4[%c0_15, %c0_16, %c0_17] : memref<1x1x256xf32, #tpu.memory_space<vmem>>, vector<1x1x256xf32>
      tpu.vector_store %arg4[%c0_15, %c0_16, %c0_17], %25 {strides = array<i32>} : memref<1x1x256xf32, #tpu.memory_space<vmem>>, vector<1x1x256xf32>,
      %c0_i32_18 = arith.constant 0 : i32
      %27 = vector.broadcast %c0_i32_18 : i32 to vector<1x1x256xi32>
      %c0_19 = arith.constant 0 : index
      %c0_20 = arith.constant 0 : index
      %c0_21 = arith.constant 0 : index
      %28 = vector.load %arg5[%c0_19, %c0_20, %c0_21] : memref<1x1x256xi32, #tpu.memory_space<vmem>>, vector<1x1x256xi32>
      tpu.vector_store %arg5[%c0_19, %c0_20, %c0_21], %27 {strides = array<i32>} : memref<1x1x256xi32, #tpu.memory_space<vmem>>, vector<1x1x256xi32>,
    } else {
    }
    %c0 = arith.constant 0 : index
    %c0_1 = arith.constant 0 : index
    %c0_2 = arith.constant 0 : index
    %3 = vector.load %arg3[%c0, %c0_1, %c0_2] : memref<1x4x256xf32, #tpu.memory_space<vmem>>, vector<1x4x256xf32>
    %4 = vector.shape_cast %3 : vector<1x4x256xf32> to vector<4x256xf32>
    %c0_3 = arith.constant 0 : index
    %c0_4 = arith.constant 0 : index
    %c0_5 = arith.constant 0 : index
    %5 = vector.load %arg4[%c0_3, %c0_4, %c0_5] : memref<1x1x256xf32, #tpu.memory_space<vmem>>, vector<1x1x256xf32>
    %6 = vector.shape_cast %5 : vector<1x1x256xf32> to vector<1x256xf32>
    %c0_6 = arith.constant 0 : index
    %c0_7 = arith.constant 0 : index
    %c0_8 = arith.constant 0 : index
    %7 = vector.load %arg5[%c0_6, %c0_7, %c0_8] : memref<1x1x256xi32, #tpu.memory_space<vmem>>, vector<1x1x256xi32>
    %8 = vector.shape_cast %7 : vector<1x1x256xi32> to vector<1x256xi32>
    %9 = vector.extract_strided_slice %4 {offsets = [1, 0], sizes = [1, 256], strides = [1, 1]} : vector<4x256xf32> to vector<1x256xf32>
    %10 = arith.cmpf ogt, %9, %6 : vector<1x256xf32>
    %c1_i32 = arith.constant 1 : i32
    %11 = vector.broadcast %c1_i32 : i32 to vector<1x256xi32>
    %12 = arith.select %10, %11, %8 : vector<1x256xi1>, vector<1x256xi32>
    %13 = arith.select %10, %9, %6 : vector<1x256xi1>, vector<1x256xf32>
    %14 = vector.extract_strided_slice %4 {offsets = [2, 0], sizes = [1, 256], strides = [1, 1]} : vector<4x256xf32> to vector<1x256xf32>
    %15 = arith.cmpf ogt, %14, %13 : vector<1x256xf32>
    %c2_i32 = arith.constant 2 : i32
    %16 = vector.broadcast %c2_i32 : i32 to vector<1x256xi32>
    %17 = arith.select %15, %16, %12 : vector<1x256xi1>, vector<1x256xi32>
    %18 = arith.select %15, %14, %13 : vector<1x256xi1>, vector<1x256xf32>
    %c0_9 = arith.constant 0 : index
    %c0_10 = arith.constant 0 : index
    %c0_11 = arith.constant 0 : index
    %19 = vector.load %arg4[%c0_9, %c0_10, %c0_11] : memref<1x1x256xf32, #tpu.memory_space<vmem>>, vector<1x1x256xf32>
    %20 = vector.shape_cast %19 : vector<1x1x256xf32> to vector<1x256xf32>
    %21 = vector.shape_cast %18 : vector<1x256xf32> to vector<1x1x256xf32>
    tpu.vector_store %arg4[%c0_9, %c0_10, %c0_11], %21 {strides = array<i32>} : memref<1x1x256xf32, #tpu.memory_space<vmem>>, vector<1x1x256xf32>,
    %c0_12 = arith.constant 0 : index
    %c0_13 = arith.constant 0 : index
    %c0_14 = arith.constant 0 : index
    %22 = vector.load %arg5[%c0_12, %c0_13, %c0_14] : memref<1x1x256xi32, #tpu.memory_space<vmem>>, vector<1x1x256xi32>
    %23 = vector.shape_cast %22 : vector<1x1x256xi32> to vector<1x256xi32>
    %24 = vector.shape_cast %17 : vector<1x256xi32> to vector<1x1x256xi32>
    tpu.vector_store %arg5[%c0_12, %c0_13, %c0_14], %24 {strides = array<i32>} : memref<1x1x256xi32, #tpu.memory_space<vmem>>, vector<1x1x256xi32>,
    return
  }
  func.func @transform_0(%arg0: i32, %arg1: i32, %arg2: i32) -> (i32, i32, i32) {
    %c0_i32 = arith.constant 0 : i32
    %0 = arith.addi %c0_i32, %arg2 : i32
    %c0_i32_0 = arith.constant 0 : i32
    return %arg0, %0, %arg1 : i32, i32, i32
  }
  func.func @transform_1(%arg0: i32, %arg1: i32, %arg2: i32) -> (i32, i32, i32) {
    %c0_i32 = arith.constant 0 : i32
    %c0_i32_0 = arith.constant 0 : i32
    return %arg0, %c0_i32, %arg1 : i32, i32, i32
  }
  func.func @transform_2(%arg0: i32, %arg1: i32, %arg2: i32) -> (i32, i32, i32) {
    %c0_i32 = arith.constant 0 : i32
    %c0_i32_0 = arith.constant 0 : i32
    return %arg0, %c0_i32, %arg1 : i32, i32, i32
  }
}

</mosaic_0001>

<llo_original>
// kernel: tpu_custom_call.1
$region0: #{tpu_custom_call.1}
  #allocation0 [shape = 'u32[]', space=smem, size = 0x4, offset = 0x4, fixed_abs, tag = 'smem constant byte address 0x4 - core index']
  #allocation1 [shape = 'u32[72,128]{1,0:T(1,128)}', space=vmem, size = 0x9000, scoped, tag = 'internal scratch']
  %s0 = inlined_call_operand.hbm [shape: f32[2,4,256], index: 0, kind: input, shape index: {}]
  %s1 = inlined_call_operand.hbm [shape: f32[2,1,256], index: 1, kind: output, shape index: {0}]
  %s2 = inlined_call_operand.hbm [shape: s32[2,1,256], index: 2, kind: output, shape index: {1}]
  %3 = xla_tuple %s1, %s2
  %s4 = sld [smem:[#allocation0]]
  $region53: #{tpu_custom_call.1} parent=0
    _
  %s6 = ssub.s32 1, %s4
  %s7 = scalar_select 0, %s6, %s4
  $region1: #{tpu_custom_call.1} parent=0
    #allocation2 [shape = 'u8[8192]{0}', space=vmem, size = 0x2000, scoped, tag = 'input window, operand 0']
    #allocation3 [shape = 's32[2]{0}', space=sflag, size = 0x8, scoped, tag = 'scoped memory for tpu_custom_call.1']
    #allocation4 [shape = 's32[2]{0}', space=sflag, size = 0x8, scoped, tag = 'scoped memory for tpu_custom_call.1']
    #allocation5 [shape = 'u8[2048]{0}', space=vmem, size = 0x800, scoped, tag = 'output window, operand 0']
    #allocation6 [shape = 'u8[2048]{0}', space=vmem, size = 0x800, scoped, tag = 'output window, operand 1']
    #allocation7 [shape = 's32[2]{0}', space=sflag, size = 0x8, scoped, tag = 'scoped memory for tpu_custom_call.1']
    %8 = vsyncpa [#allocation3], 0
    %s9 = scalar_lea.sflag [#allocation3], 1
    %10 = vsyncpa %s9, 0
    %11 = vsyncpa [#allocation4], 0
    %s12 = scalar_lea.sflag [#allocation4], 1
    %13 = vsyncpa %s12, 0
    %14 = vsyncpa [#allocation7], 0
    %s15 = scalar_lea.sflag [#allocation7], 1
    %16 = vsyncpa %s15, 0
    loop: start=0, step=1, limit=4
    $region2: #{tpu_custom_call.1} parent=1 // loop_pre_header
      _
    $region3: #{tpu_custom_call.1} parent=1 // loop_header
      %s18 = sphi 0, %s22
      %p19 = scmp.ge.s32.totalorder %s18, 4
      %s25 = sphi 0, %s44
      %s26 = sphi 0, %s40
      %s27 = sphi 0, %s36
      %s28 = sphi 0, %s25
      %s29 = sphi 0, %s26
      %s30 = sphi 0, %s27
      %s31 = sphi 0, %s28
      %s32 = sphi 0, %s29
      %s33 = sphi 0, %s30
      %s51 = sphi 0, %s53
      %s54 = sphi 0, %s51
      %s55 = sphi 0, %s54
      %s71 = sphi 0, %s55
      %s79 = sphi 0, %s81
      %s82 = sphi 0, %s79
      %s83 = sphi 0, %s82
      %s99 = sphi 0, %s83
      %s107 = sphi 0, %s109
      %s110 = sphi 0, %s107
      %s111 = sphi 0, %s110
      %s127 = sphi 0, %s111
    $region4: #{tpu_custom_call.1} parent=1 // loop_header_branch
      %21 = sbr.rel (%p19) target = $region8
    $region5: #{tpu_custom_call.1} parent=1 // loop_body
      %s23 = ssub.s32 %s18, 1
      %s24 = ssub.s32 %s18, 2
      %s34 = sadd.s32 1, %s27
      %p35 = scmp.ge.s32.totalorder %s34, 1
      %s36 = scalar_select %p35, 0, %s34
      %s37 = sadd.s32 1, %s26
      %s38 = scalar_select %p35, %s37, %s26
      %p39 = scmp.ge.s32.totalorder %s38, 1
      %s40 = scalar_select %p39, 0, %s38
      %s41 = sadd.s32 1, %s25
      %s42 = scalar_select %p39, %s41, %s25
      %p43 = scmp.ge.s32.totalorder %s42, 2
      %s44 = scalar_select %p43, 0, %s42
      %s45 = ssub.s32 %s25, %s44
      %s46 = ssub.s32 %s27, %s36
      %s47 = sor.u32 %s45, %s46
      %s48 = ssub.s32 %s26, %s40
      %s49 = sor.u32 %s47, %s48
      %p50 = scmp.eq.s32.totalorder %s49, 0
      %s52 = sadd.s32 %s51, 1
      %s53 = scalar_select %p50, %s51, %s52
      %p56 = pneg %p50
      %p57 = scmp.eq.s32.totalorder %s18, 1
      %p58 = por %p56, %p57
      %p59 = scmp.ne.s32.totalorder %s51, %s54
      %p60 = scmp.eq.s32.totalorder %s18, 0
      %p61 = por %p59, %p60
      %p62 = scmp.ne.s32.totalorder %s51, %s54
      %p63 = scmp.eq.s32.totalorder %s23, 1
      %p64 = por %p62, %p63
      %p65 = scmp.ne.s32.totalorder %s54, %s55
      %p66 = scmp.eq.s32.totalorder %s23, 0
      %p67 = por %p65, %p66
      %p68 = scmp.ne.s32.totalorder %s54, %s55
      %p69 = scmp.eq.s32.totalorder %s24, 1
      %p70 = por %p68, %p69
      %p72 = scmp.ne.s32.totalorder %s55, %s71
      %p73 = scmp.eq.s32.totalorder %s24, 0
      %p74 = por %p72, %p73
      %s75 = ssub.s32 %s25, %s44
      %s76 = ssub.s32 %s26, %s40
      %s77 = sor.u32 %s75, %s76
      %p78 = scmp.eq.s32.totalorder %s77, 0
      %s80 = sadd.s32 %s79, 1
      %s81 = scalar_select %p78, %s79, %s80
      %p84 = pneg %p78
      %p85 = scmp.eq.s32.totalorder %s18, 1
      %p86 = por %p84, %p85
      %p87 = scmp.ne.s32.totalorder %s79, %s82
      %p88 = scmp.eq.s32.totalorder %s18, 0
      %p89 = por %p87, %p88
      %p90 = scmp.ne.s32.totalorder %s79, %s82
      %p91 = scmp.eq.s32.totalorder %s23, 1
      %p92 = por %p90, %p91
      %p93 = scmp.ne.s32.totalorder %s82, %s83
      %p94 = scmp.eq.s32.totalorder %s23, 0
      %p95 = por %p93, %p94
      %p96 = scmp.ne.s32.totalorder %s82, %s83
      %p97 = scmp.eq.s32.totalorder %s24, 1
      %p98 = por %p96, %p97
      %p100 = scmp.ne.s32.totalorder %s83, %s99
      %p101 = scmp.eq.s32.totalorder %s24, 0
      %p102 = por %p100, %p101
      %s103 = ssub.s32 %s25, %s44
      %s104 = ssub.s32 %s26, %s40
      %s105 = sor.u32 %s103, %s104
      %p106 = scmp.eq.s32.totalorder %s105, 0
      %s108 = sadd.s32 %s107, 1
      %s109 = scalar_select %p106, %s107, %s108
      %p112 = pneg %p106
      %p113 = scmp.eq.s32.totalorder %s18, 1
      %p114 = por %p112, %p113
      %p115 = scmp.ne.s32.totalorder %s107, %s110
      %p116 = scmp.eq.s32.totalorder %s18, 0
      %p117 = por %p115, %p116
      %p118 = scmp.ne.s32.totalorder %s107, %s110
      %p119 = scmp.eq.s32.totalorder %s23, 1
      %p120 = por %p118, %p119
      %p121 = scmp.ne.s32.totalorder %s110, %s111
      %p122 = scmp.eq.s32.totalorder %s23, 0
      %p123 = por %p121, %p122
      %p124 = scmp.ne.s32.totalorder %s110, %s111
      %p125 = scmp.eq.s32.totalorder %s24, 1
      %p126 = por %p124, %p125
      %p128 = scmp.ne.s32.totalorder %s111, %s127
      %p129 = scmp.eq.s32.totalorder %s24, 0
      %p130 = por %p128, %p129
      %p131 = scmp.le.s32.totalorder 1, %s18
      %p132 = scmp.lt.s32.totalorder %s18, 3
      %p133 = pnand %p131, %p132
      %p134 = pneg %p133
      // Predicated region
      $region9: #{tpu_custom_call.1} parent=5 // pred_check
        _
      $region10: #{tpu_custom_call.1} parent=5 // pred_check_branch
        %136 = sbr.rel (%p133) target = $region12
      $region11: #{tpu_custom_call.1} parent=5 // pred_region
        %s137 = ssub.s32 %s18, 1
      $region12: #{tpu_custom_call.1} parent=5 // pred_fallthru
        _
      %p138 = scmp.lt.s32.totalorder %s18, 2
      // Predicated region
      $region13: #{tpu_custom_call.1} parent=5 // pred_check
        %p139 = pneg %p138
      $region14: #{tpu_custom_call.1} parent=5 // pred_check_branch
        %141 = sbr.rel (%p139) target = $region16
      $region15: #{tpu_custom_call.1} parent=5 // pred_region
        // Predicated region
        $region17: #{tpu_custom_call.1} parent=15 // pred_check
          %p142 = pneg %p61
        $region18: #{tpu_custom_call.1} parent=15 // pred_check_branch
          %144 = sbr.rel (%p142) target = $region20
        $region19: #{tpu_custom_call.1} parent=15 // pred_region
          %s145 = sand.u32 %s51, 1
          %s146 = scalar_lea.sflag [#allocation3], %s145
          %s147 = sand.u32 %s51, 1
          %s148 = smul.addr %s147, 8
          %s149 = scalar_lea.vmem [#allocation2], %s148
          %s150 = smul.u32 2, %s26
          %152 = vsyncadd %s146, 0
          %s153 = smul.addr %s27, 2
          %s154 = sadd.s32 %s150, %s153
          %s155 = smul.addr %s25, 2
          %s156 = sadd.s32 %s154, %s155
          %s157 = smul.addr %s156, 4
          %s158 = scalar_lea.hbm %s0, %s157
          %s160 = sshll.u32 %s158, 4
          %s161 = int_to_ptr.hbm [resolvable:$true] %s160
          %s162 = sshll.u32 %s149, 4
          %s163 = int_to_ptr.vmem [resolvable:$true] %s162
          %165 = dma.hbm_to_vmem [thread:$0]  %s161, 128, %s163, %s146
        $region20: #{tpu_custom_call.1} parent=15 // pred_fallthru
          _
      $region16: #{tpu_custom_call.1} parent=5 // pred_fallthru
        _
      %p166 = scmp.le.s32.totalorder 1, %s18
      %p167 = scmp.lt.s32.totalorder %s18, 3
      %p168 = pnand %p166, %p167
      %p169 = pneg %p168
      // Predicated region
      $region21: #{tpu_custom_call.1} parent=5 // pred_check
        _
      $region22: #{tpu_custom_call.1} parent=5 // pred_check_branch
        %171 = sbr.rel (%p168) target = $region24
      $region23: #{tpu_custom_call.1} parent=5 // pred_region
        %s172 = ssub.s32 %s18, 1
        %s173 = sand.u32 %s54, 1
        %s174 = scalar_lea.sflag [#allocation3], %s173
        %s175 = sand.u32 %s54, 1
        %s176 = smul.addr %s175, 8
        %s177 = scalar_lea.vmem [#allocation2], %s176
        // Predicated region
        $region25: #{tpu_custom_call.1} parent=23 // pred_check
          %p178 = pneg %p67
        $region26: #{tpu_custom_call.1} parent=23 // pred_check_branch
          %180 = sbr.rel (%p178) target = $region28
        $region27: #{tpu_custom_call.1} parent=23 // pred_region
          %182 = dma.done %s174, 128
        $region28: #{tpu_custom_call.1} parent=23 // pred_fallthru
          _
        %s183 = sand.u32 %s54, 1
        %s184 = scalar_lea.sflag [#allocation3], %s183
        %s185 = sand.u32 %s54, 1
        %s186 = smul.addr %s185, 8
        %s187 = scalar_lea.vmem [#allocation2], %s186
        %p188 = pneg %p67
        %p189 = pneg %p64
        %p190 = pneg %p95
        %p191 = pneg %p92
        %s192 = sand.u32 %s82, 1
        %s193 = scalar_lea.sflag [#allocation4], %s192
        %s194 = sand.u32 %s82, 1
        %s195 = smul.addr %s194, 2
        %s196 = scalar_lea.vmem [#allocation5], %s195
        %p197 = pneg %p123
        %p198 = pneg %p120
        %s199 = sand.u32 %s110, 1
        %s200 = scalar_lea.sflag [#allocation7], %s199
        %s201 = sand.u32 %s110, 1
        %s202 = smul.addr %s201, 2
        %s203 = scalar_lea.vmem [#allocation6], %s202
        %s204 = smul.u32 2, %s29
        %s205 = smul.u32 2, %s29
        %s206 = smul.u32 2, %s29
        %p207 = scmp.eq.s32.totalorder %s30, 0
        // Predicated region
        $region29: #{tpu_custom_call.1} parent=23 // pred_check
          %p208 = pneg %p207
        $region30: #{tpu_custom_call.1} parent=23 // pred_check_branch
          %210 = sbr.rel (%p208) target = $region32
        $region31: #{tpu_custom_call.1} parent=23 // pred_region
          %v211 = vlaneseq
          %vm212 = vcmp.ge.s32.totalorder %v211, 0
          %vm213 = vcmp.lt.s32.totalorder %v211, 256
          %vm214 = vmand %vm212, %vm213
          %215 = vst.msk [vmem:[%s196] sm:$0x3] %vm214, -inf
          %216 = vst.msk [vmem:[%s203] sm:$0x3] %vm214, 0
        $region32: #{tpu_custom_call.1} parent=23 // pred_fallthru
          _
        %v217 = vld [vmem:[%s177] sm:$0xff]
        %v218 = vld [vmem:[%s196] sm:$0x3]
        %v219 = vld [vmem:[%s203] sm:$0x3]
        %v222 = vunpack.c.l.s4 286326784
        %v223 = vunpack.c.0.s8 %v222
        %v224 = vperm.slane %v218, %v223
        %vm226 = vcmp.gt.f32.partialorder %v217, %v224
        %v228 = vunpack.c.l.s4 286326784
        %v229 = vunpack.c.0.s8 %v228
        %v230 = vperm.slane %v219, %v229
        %v231 = vsel %vm226, 1, %v230
        %v232 = vsel %vm226, %v217, %v224
        %v234 = vrot.slane %v232, 7
        %vm236 = vcmp.gt.f32.partialorder %v217, %v234
        %v237 = vrot.slane %v231, 7
        %v238 = vsel %vm236, 2, %v237
        %v239 = vsel %vm236, %v217, %v234
        %241 = vst [vmem:[#allocation1] sm:$0xff] %v239
        %s242 = scalar_lea.vmem [#allocation1], 2
        %v243 = vld [vmem:[%s242] ss:$4 sm:$0xff]
        %v245 = vlaneseq
        %vm246 = vcmp.ge.s32.totalorder %v245, 0
        %vm247 = vcmp.lt.s32.totalorder %v245, 256
        %vm248 = vmand %vm246, %vm247
        %249 = vst.msk [vmem:[%s196] sm:$0x3] %vm248, %v243
        %250 = vst [vmem:[#allocation1] sm:$0xff] %v238
        %s251 = scalar_lea.vmem [#allocation1], 2
        %v252 = vld [vmem:[%s251] ss:$4 sm:$0xff]
        %253 = vst.msk [vmem:[%s203] sm:$0x3] %vm248, %v252
        %s254 = sand.u32 %s82, 1
        %s255 = scalar_lea.sflag [#allocation4], %s254
        %s256 = sand.u32 %s82, 1
        %s257 = smul.addr %s256, 2
        %s258 = scalar_lea.vmem [#allocation5], %s257
        %s259 = sand.u32 %s110, 1
        %s260 = scalar_lea.sflag [#allocation7], %s259
        %s261 = sand.u32 %s110, 1
        %s262 = smul.addr %s261, 2
        %s263 = scalar_lea.vmem [#allocation6], %s262
        // Predicated region
        $region33: #{tpu_custom_call.1} parent=23 // pred_check
          %p264 = pneg %p92
        $region34: #{tpu_custom_call.1} parent=23 // pred_check_branch
          %266 = sbr.rel (%p264) target = $region36
        $region35: #{tpu_custom_call.1} parent=23 // pred_region
          %s267 = smul.u32 2, %s29
          %269 = vsyncadd %s255, 0
          %s270 = smul.addr %s28, 2
          %s271 = sadd.s32 %s267, %s270
          %s272 = scalar_lea.hbm %s1, %s271
          %s274 = sshll.u32 %s258, 4
          %s275 = int_to_ptr.vmem [resolvable:$true] %s274
          %s276 = sshll.u32 %s272, 4
          %s277 = int_to_ptr.hbm [resolvable:$true] %s276
          %279 = dma.vmem_to_hbm [thread:$0]  %s275, 32, %s277, %s255
        $region36: #{tpu_custom_call.1} parent=23 // pred_fallthru
          _
        // Predicated region
        $region37: #{tpu_custom_call.1} parent=23 // pred_check
          %p280 = pneg %p120
        $region38: #{tpu_custom_call.1} parent=23 // pred_check_branch
          %282 = sbr.rel (%p280) target = $region40
        $region39: #{tpu_custom_call.1} parent=23 // pred_region
          %s283 = smul.u32 2, %s29
          %285 = vsyncadd %s260, 0
          %s286 = smul.addr %s28, 2
          %s287 = sadd.s32 %s283, %s286
          %s288 = scalar_lea.hbm %s2, %s287
          %s290 = sshll.u32 %s263, 4
          %s291 = int_to_ptr.vmem [resolvable:$true] %s290
          %s292 = sshll.u32 %s288, 4
          %s293 = int_to_ptr.hbm [resolvable:$true] %s292
          %295 = dma.vmem_to_hbm [thread:$0]  %s291, 32, %s293, %s260
        $region40: #{tpu_custom_call.1} parent=23 // pred_fallthru
          _
      $region24: #{tpu_custom_call.1} parent=5 // pred_fallthru
        _
      %p296 = scmp.le.s32.totalorder 2, %s18
      // Predicated region
      $region41: #{tpu_custom_call.1} parent=5 // pred_check
        %p297 = pneg %p296
      $region42: #{tpu_custom_call.1} parent=5 // pred_check_branch
        %299 = sbr.rel (%p297) target = $region44
      $region43: #{tpu_custom_call.1} parent=5 // pred_region
        %s300 = ssub.s32 %s18, 2
        // Predicated region
        $region45: #{tpu_custom_call.1} parent=43 // pred_check
          %p301 = pneg %p98
        $region46: #{tpu_custom_call.1} parent=43 // pred_check_branch
          %303 = sbr.rel (%p301) target = $region48
        $region47: #{tpu_custom_call.1} parent=43 // pred_region
          %s304 = sand.u32 %s83, 1
          %s305 = scalar_lea.sflag [#allocation4], %s304
          %s306 = sand.u32 %s83, 1
          %s307 = smul.addr %s306, 2
          %s308 = scalar_lea.vmem [#allocation5], %s307
          %310 = dma.done %s305, 32
        $region48: #{tpu_custom_call.1} parent=43 // pred_fallthru
          _
        // Predicated region
        $region49: #{tpu_custom_call.1} parent=43 // pred_check
          %p311 = pneg %p126
        $region50: #{tpu_custom_call.1} parent=43 // pred_check_branch
          %313 = sbr.rel (%p311) target = $region52
        $region51: #{tpu_custom_call.1} parent=43 // pred_region
          %s314 = sand.u32 %s111, 1
          %s315 = scalar_lea.sflag [#allocation7], %s314
          %s316 = sand.u32 %s111, 1
          %s317 = smul.addr %s316, 2
          %s318 = scalar_lea.vmem [#allocation6], %s317
          %320 = dma.done %s315, 32
        $region52: #{tpu_custom_call.1} parent=43 // pred_fallthru
          _
      $region44: #{tpu_custom_call.1} parent=5 // pred_fallthru
        _
    $region6: #{tpu_custom_call.1} parent=1 // loop_footer
      %s22 = sadd.s32 1, %s18
    $region7: #{tpu_custom_call.1} parent=1 // loop_footer_branch
      %17 = sbr.rel target = $region3
    $region8: #{tpu_custom_call.1} parent=1 // loop_exit
      _
    %321 = vsyncpa [#allocation3], 1
    %s322 = scalar_lea.sflag [#allocation3], 1
    %323 = vsyncpa %s322, 1
    %324 = vsyncpa [#allocation4], 1
    %s325 = scalar_lea.sflag [#allocation4], 1
    %326 = vsyncpa %s325, 1
    %327 = vsyncpa [#allocation7], 1
    %s328 = scalar_lea.sflag [#allocation7], 1
    %329 = vsyncpa %s328, 1

</llo_original>
